<compile_context>
chip_gen: v5e
topology: v5e:2x2
jax: 0.10.0
libtpu: 0.0.40
codegen_flags: <defaults>
</compile_context>

<pallas_src>
import functools

import jax
import jax.numpy as jnp
from jax import lax
from jax.experimental import pallas as pl
from jax.experimental.pallas import tpu as pltpu


# ---------------------------------------------------------------------------
# small host-side helpers
# ---------------------------------------------------------------------------

_BITCAST_LOW_FIRST = []  # memo: does bitcast(u32 -> bf16) put the low half at index 0?


def _bitcast_low_half_first():
    """Probe XLA's bitcast_convert_type sub-element ordering once (concrete)."""
    if not _BITCAST_LOW_FIRST:
        pair = lax.bitcast_convert_type(
            jnp.array(0x3F800000, dtype=jnp.uint32), jnp.bfloat16)  # f32(1.0) bits
        # high half 0x3F80 == bf16(1.0); if index 1 is 1.0 the low half is first.
        _BITCAST_LOW_FIRST.append(bool(float(pair[1]) == 1.0))
    return _BITCAST_LOW_FIRST[0]


def _vmem_budget_bytes():
    try:
        cap = pltpu.get_tpu_info().vmem_capacity_bytes
    except Exception:
        cap = 64 * 1024 * 1024  # v7x-sized conservative fallback
    return min(int(cap * 0.55), 48 * 1024 * 1024)


def _tile_vmem_bytes(tl, c, ntaps, in_itemsize, out_col_bytes):
    w = 2 * ntaps * c * c * in_itemsize          # double-buffered resident weights
    xb = 2 * c * tl * in_itemsize                # double-buffered x block
    ob = 2 * c * tl * out_col_bytes              # double-buffered output block
    tmp = (ntaps + 6) * c * tl * 4               # f32 z / rolled / even / odd headroom
    return w + xb + ob + tmp


def _choose_tile_l(L, c, ntaps, n_batch, in_itemsize, out_col_bytes):
    # lane-dense candidates: multiples of 128 dividing L, else the full length
    cands = [t for t in range(128, L + 1, 128) if L % t == 0] or [L]
    budget = _vmem_budget_bytes()
    fits = [t for t in cands
            if _tile_vmem_bytes(t, c, ntaps, in_itemsize, out_col_bytes) <= budget]
    fits = fits or [min(cands)]
    tl = max(fits)
    # prefer >= 2 grid steps so both v7x TensorCores get work on small batches
    if n_batch * (L // tl) < 2:
        smaller = [t for t in fits if t < tl]
        if smaller:
            tl = max(smaller)
    return tl


# ---------------------------------------------------------------------------
# kernel
# ---------------------------------------------------------------------------

def _upsample1d_kernel(x_ref, halo_ref, w_ref, b_ref, out_ref, *,
                       ntaps, packed, low_first):
    """One (batch, L-tile) step.

    x_ref   : (1, C, TL)        activation tile, NCL orientation (L on lanes)
    halo_ref: (1, 1, C, 2)      columns [x[:, tile_start-1] | x[:, tile_end]]
    w_ref   : (ntaps*C, C)      [W1^T ; W2^T ; (W3^T ;) W0^T]
    b_ref   : (C, 1)            bias, f32
    out_ref : packed  -> (1, C, TL)    uint32 (bf16 even/odd pair per lane)
              unpacked-> (1, 2, C, TL) phase-major (0 = even, 1 = odd)
    """
    x = x_ref[0]                       # (C, TL)
    halo = halo_ref[0, 0]              # (C, 2)
    w = w_ref[...]                     # (ntaps*C, C)
    c, tl = x.shape

    # One aligned MXU dot for all taps + a tiny dot for the two halo columns
    # (no xcat concatenate, no TL+2 misaligned matmul dim).
    z = jnp.dot(w, x, preferred_element_type=jnp.float32)        # (ntaps*C, TL)
    zh = jnp.dot(w, halo, preferred_element_type=jnp.float32)    # (ntaps*C, 2)

    b = b_ref[...]                                                # (C, 1) f32
    lane = lax.broadcasted_iota(jnp.int32, (c, tl), 1)

    z1 = z[0:c]
    z2 = z[c:2 * c]
    if ntaps == 4:
        # even: x@W1 + xprev@W3 ; odd: x@W2 + xnext@W0  (shifts via XLU roll,
        # single boundary lane patched from the halo dot).
        z3s = pltpu.roll(z[2 * c:3 * c], 1, axis=1)               # lane j <- z3[:, j-1]
        z0s = pltpu.roll(z[3 * c:4 * c], tl - 1, axis=1)          # lane j <- z0[:, j+1]
        prev_fix = zh[2 * c:3 * c, 0:1]                           # W3^T @ x[tile_start-1]
        next_fix = zh[3 * c:4 * c, 1:2]                           # W0^T @ x[tile_end]
        even = z1 + jnp.where(lane == 0, prev_fix, z3s) + b
        odd = z2 + jnp.where(lane == tl - 1, next_fix, z0s) + b
    else:
        # K == 3: even has the single tap W1; odd: x@W2 + xnext@W0
        z0s = pltpu.roll(z[2 * c:3 * c], tl - 1, axis=1)
        next_fix = zh[2 * c:3 * c, 1:2]
        even = z1 + b
        odd = z2 + jnp.where(lane == tl - 1, next_fix, z0s) + b

    if packed:
        # bf16 output: round each phase to bf16 and pack (even, odd) into one
        # u32 lane -> the store already carries the final (N, C, 2L) memory
        # image; the wrapper bitcast+reshape is free.  bf16 widened to f32 has
        # zero low 16 bits, so a single shift+or assembles the pair.
        e_bits = pltpu.bitcast(even.astype(jnp.bfloat16).astype(jnp.float32),
                               jnp.uint32)
        o_bits = pltpu.bitcast(odd.astype(jnp.bfloat16).astype(jnp.float32),
                               jnp.uint32)
        if low_first:
            packed_u32 = (e_bits >> 16) | o_bits
        else:
            packed_u32 = (o_bits >> 16) | e_bits
        out_ref[0] = packed_u32
    else:
        out_ref[0, 0] = even.astype(out_ref.dtype)
        out_ref[0, 1] = odd.astype(out_ref.dtype)


# ---------------------------------------------------------------------------
# wrapper
# ---------------------------------------------------------------------------

def upsample1d(x_ncl, weight, bias, *, tile_l=None):
    """ConvTranspose1d(dim, dim, K, stride=2, padding=1) via Pallas.

    x_ncl  : (N, C, L)        PyTorch NCL layout (f32 or bf16)
    weight : (Cin, Cout, K)   PyTorch ConvTranspose1d weight, K in {3, 4}
    bias   : (Cout,)
    returns: (N, C, L_out)    L_out = 2L (K=4) or 2L-1 (K=3); dtype == x.dtype
    """
    N, C, L = x_ncl.shape
    Cin, Cout, K = weight.shape
    assert Cin == C and Cout == C, "Upsample1d uses a square (dim, dim) conv"
    assert K in (3, 4)

    out_dtype = x_ncl.dtype
    compute_dtype = out_dtype
    # TODO(synk): optionally cast f32 activations/weights to bf16 here (perf
    # review item) when ~1e-3 relative error is acceptable to the caller.
    packed = out_dtype == jnp.bfloat16           # in-kernel even/odd bit packing
    low_first = _bitcast_low_half_first() if packed else True

    ntaps = 4 if K == 4 else 3
    in_itemsize = jnp.dtype(compute_dtype).itemsize
    out_col_bytes = 2 * jnp.dtype(out_dtype).itemsize   # bytes of output per (c, input col)

    if tile_l is None:
        TL = _choose_tile_l(L, C, ntaps, N, in_itemsize, out_col_bytes)
    else:
        TL = tile_l
        assert L % TL == 0 and (TL % 128 == 0 or TL == L), \
            "tile_l must divide L and be a multiple of 128 (or equal L)"
    nT = L // TL

    x = x_ncl.astype(compute_dtype)                              # (N, C, L), no transpose

    # 2-column halo per (batch, tile): [x[:, t*TL-1] | x[:, (t+1)*TL]], zeros at edges.
    zero_col = jnp.zeros((N, C, 1), compute_dtype)
    if nT > 1:
        prev_cols = x[:, :, TL - 1:L - 1:TL]                     # (N, C, nT-1)
        next_cols = x[:, :, TL:L:TL]                             # (N, C, nT-1)
        prev_all = jnp.concatenate([zero_col, prev_cols], axis=2)   # (N, C, nT)
        next_all = jnp.concatenate([next_cols, zero_col], axis=2)   # (N, C, nT)
    else:
        prev_all = zero_col
        next_all = zero_col
    halo = jnp.stack([prev_all, next_all], axis=-1)              # (N, C, nT, 2)
    halo = jnp.transpose(halo, (0, 2, 1, 3))                     # (N, nT, C, 2)  (tiny)

    # Per-tap weights stacked along the output-channel (sublane) dim so each
    # tile is one MXU dot: rows [W1^T ; W2^T ; (W3^T ;) W0^T].
    wT = jnp.transpose(weight.astype(compute_dtype), (2, 1, 0))  # (K, Cout, Cin)
    if K == 4:
        w_stack = jnp.concatenate([wT[1], wT[2], wT[3], wT[0]], axis=0)   # (4C, C)
    else:
        w_stack = jnp.concatenate([wT[1], wT[2], wT[0]], axis=0)          # (3C, C)
    b = bias.astype(jnp.float32).reshape(C, 1)                   # f32 epilogue

    kernel = functools.partial(_upsample1d_kernel, ntaps=ntaps,
                               packed=packed, low_first=low_first)

    if packed:
        out_shape = jax.ShapeDtypeStruct((N, C, L), jnp.uint32)
        out_spec = pl.BlockSpec((1, C, TL), lambda n, t: (n, 0, t))
        out_hbm_bytes = N * C * L * 4
    else:
        out_shape = jax.ShapeDtypeStruct((N, 2, C, L), out_dtype)
        out_spec = pl.BlockSpec((1, 2, C, TL), lambda n, t: (n, 0, 0, t))
        out_hbm_bytes = N * 2 * C * L * jnp.dtype(out_dtype).itemsize

    vmem_use = _tile_vmem_bytes(TL, C, ntaps, in_itemsize, out_col_bytes)
    vmem_limit = int(min(64 * 1024 * 1024,
                         max(32 * 1024 * 1024, int(1.5 * vmem_use))))

    cost = pl.CostEstimate(
        flops=2 * ntaps * N * L * C * C,
        transcendentals=0,
        bytes_accessed=N * C * L * in_itemsize + out_hbm_bytes
        + ntaps * C * C * in_itemsize)

    out = pl.pallas_call(
        kernel,
        out_shape=out_shape,
        grid_spec=pltpu.PrefetchScalarGridSpec(
            num_scalar_prefetch=0,
            grid=(N, nT),
            in_specs=[
                pl.BlockSpec((1, C, TL), lambda n, t: (n, 0, t)),        # x (lane-dense)
                pl.BlockSpec((1, 1, C, 2), lambda n, t: (n, t, 0, 0)),   # halo columns
                pl.BlockSpec((ntaps * C, C), lambda n, t: (0, 0)),       # weights resident
                pl.BlockSpec((C, 1), lambda n, t: (0, 0)),               # bias resident
            ],
            out_specs=out_spec,
        ),
        compiler_params=pltpu.CompilerParams(
            dimension_semantics=("parallel", "parallel"),
            vmem_limit_bytes=vmem_limit),
        cost_estimate=cost,
    )(x, halo, w_stack, b)

    if packed:
        # free: reinterpret each u32 lane as its (even, odd) bf16 pair
        pairs = lax.bitcast_convert_type(out, jnp.bfloat16)      # (N, C, L, 2)
        y = pairs.reshape(N, C, 2 * L)
    else:
        # single XLA transpose folds the even/odd interleave for 32-bit dtypes
        y = jnp.moveaxis(out, 1, 3).reshape(N, C, 2 * L)

    if K == 3:
        y = y[:, :, :2 * L - 1]
    return y


# ---------------------------------------------------------------------------
# reference + self-test
# ---------------------------------------------------------------------------

def _reference_conv_transpose1d(x_ncl, weight, bias):
    """Pure-JAX reference (lax.conv_general_dilated emulating ConvTranspose1d)."""
    K = weight.shape[-1]
    pad = K - 1 - 1  # kernel_size - 1 - padding
    w_oik = jnp.flip(weight, axis=-1).transpose(1, 0, 2)         # (Cout, Cin, K)
    y = lax.conv_general_dilated(
        x_ncl.astype(jnp.float32), w_oik.astype(jnp.float32),
        window_strides=(1,), padding=[(pad, pad)], lhs_dilation=(2,),
        dimension_numbers=("NCH", "OIH", "NCH"))
    return y + bias.reshape(1, -1, 1)


if __name__ == "__main__":
    key = jax.random.PRNGKey(0)
    N, C, L = 2, 8, 16  # batch, dim (channels), spatial length

    kx, kw4, kb4, kw3, kb3, kx2 = jax.random.split(key, 6)
    x = jax.random.normal(kx, (N, C, L), dtype=jnp.float32)

    ok = True
    # Tolerance note: the kernel's MXU dot and the XLA reference conv may each
    # use default (possibly bf16-truncated) f32 matmul precision on TPU, so a
    # few-1e-3 discrepancy is possible; 2e-2 still catches any real bug.
    TOL = dict(atol=2e-2, rtol=2e-2)

    # env == 'hop...'  -> ConvTranspose1d(dim, dim, 4, 2, 1)
    w4 = jax.random.normal(kw4, (C, C, 4), dtype=jnp.float32) * 0.1
    b4 = jax.random.normal(kb4, (C,), dtype=jnp.float32) * 0.1
    y4 = jax.block_until_ready(upsample1d(x, w4, b4))
    ref4 = _reference_conv_transpose1d(x, w4, b4)
    ok &= y4.shape == (N, C, 2 * L)
    ok &= bool(jnp.allclose(y4, ref4, **TOL))

    # other env -> ConvTranspose1d(dim, dim, 3, 2, 1)
    w3 = jax.random.normal(kw3, (C, C, 3), dtype=jnp.float32) * 0.1
    b3 = jax.random.normal(kb3, (C,), dtype=jnp.float32) * 0.1
    y3 = jax.block_until_ready(upsample1d(x, w3, b3))
    ref3 = _reference_conv_transpose1d(x, w3, b3)
    ok &= y3.shape == (N, C, 2 * L - 1)
    ok &= bool(jnp.allclose(y3, ref3, **TOL))

    # multi-tile path (grid (1, 2): halo columns exercised across tile edges)
    L2 = 256
    x2 = jax.random.normal(kx2, (1, C, L2), dtype=jnp.float32)
    y4t = jax.block_until_ready(upsample1d(x2, w4, b4, tile_l=128))
    ref4t = _reference_conv_transpose1d(x2, w4, b4)
    ok &= y4t.shape == (1, C, 2 * L2)
    ok &= bool(jnp.allclose(y4t, ref4t, **TOL))

    y3t = jax.block_until_ready(upsample1d(x2, w3, b3, tile_l=128))
    ref3t = _reference_conv_transpose1d(x2, w3, b3)
    ok &= y3t.shape == (1, C, 2 * L2 - 1)
    ok &= bool(jnp.allclose(y3t, ref3t, **TOL))

    # bf16 activations/weights: packed u32 store path (kernel writes the final
    # NCL memory image), f32 accumulation + f32 bias epilogue, bf16 out.
    ybf = jax.block_until_ready(upsample1d(x.astype(jnp.bfloat16), w4, b4))
    ok &= ybf.dtype == jnp.bfloat16
    ok &= bool(jnp.allclose(ybf.astype(jnp.float32), ref4, atol=1e-1, rtol=1e-1))

    ybft = jax.block_until_ready(
        upsample1d(x2.astype(jnp.bfloat16), w4, b4, tile_l=128))
    ok &= ybft.dtype == jnp.bfloat16
    ok &= bool(jnp.allclose(ybft.astype(jnp.float32), ref4t, atol=1e-1, rtol=1e-1))

    print("KERNEL_OK" if ok else "MISMATCH")
</pallas_src>

<mosaic_0001>
module attributes {stable_mosaic.version = 11 : i64} {
  func.func @_upsample1d_kernel(%arg0: i32, %arg1: i32, %arg2: memref<1x8x16xf32, #tpu.memory_space<vmem>>, %arg3: memref<1x1x8x2xf32, #tpu.memory_space<vmem>>, %arg4: memref<32x8xf32, #tpu.memory_space<vmem>>, %arg5: memref<8x1xf32, #tpu.memory_space<vmem>>, %arg6: memref<1x2x8x16xf32, #tpu.memory_space<vmem>>) attributes {dimension_semantics = [#tpu.dimension_semantics<parallel>, #tpu.dimension_semantics<parallel>], iteration_bounds = array<i64: 2, 1>, scalar_prefetch = 0 : i64, scratch_operands = 0 : i64, tpu.core_type = #tpu.core_type<tc>, window_params = [{transform_indices = @transform_0, window_bounds = array<i64: 1, 8, 16>}, {transform_indices = @transform_1, window_bounds = array<i64: 1, 1, 8, 2>}, {pipeline_mode = #tpu.pipeline_mode<synchronous>, transform_indices = @transform_2, window_bounds = array<i64: 32, 8>}, {pipeline_mode = #tpu.pipeline_mode<synchronous>, transform_indices = @transform_3, window_bounds = array<i64: 8, 1>}, {transform_indices = @transform_4, window_bounds = array<i64: 1, 2, 8, 16>}]} {
    %c0 = arith.constant 0 : index
    %c0_0 = arith.constant 0 : index
    %c0_1 = arith.constant 0 : index
    %0 = vector.load %arg2[%c0, %c0_0, %c0_1] : memref<1x8x16xf32, #tpu.memory_space<vmem>>, vector<1x8x16xf32>
    %1 = vector.shape_cast %0 : vector<1x8x16xf32> to vector<8x16xf32>
    %c0_2 = arith.constant 0 : index
    %c0_3 = arith.constant 0 : index
    %c0_4 = arith.constant 0 : index
    %c0_5 = arith.constant 0 : index
    %2 = vector.load %arg3[%c0_2, %c0_3, %c0_4, %c0_5] : memref<1x1x8x2xf32, #tpu.memory_space<vmem>>, vector<1x1x8x2xf32>
    %3 = vector.shape_cast %2 : vector<1x1x8x2xf32> to vector<8x2xf32>
    %c0_6 = arith.constant 0 : index
    %c0_7 = arith.constant 0 : index
    %4 = vector.load %arg4[%c0_6, %c0_7] : memref<32x8xf32, #tpu.memory_space<vmem>>, vector<32x8xf32>
    %cst = arith.constant dense<0.000000e+00> : vector<32x16xf32>
    %5 = tpu.matmul %4, %1, %cst {dimension_numbers = #tpu.dot_dimension_numbers<[1], [0], [0], [1], [0, 0, 1, 1], [], []>} : vector<32x8xf32>, vector<8x16xf32>, vector<32x16xf32> -> vector<32x16xf32>
    %cst_8 = arith.constant dense<0.000000e+00> : vector<32x2xf32>
    %6 = tpu.matmul %4, %3, %cst_8 {dimension_numbers = #tpu.dot_dimension_numbers<[1], [0], [0], [1], [0, 0, 1, 1], [], []>} : vector<32x8xf32>, vector<8x2xf32>, vector<32x2xf32> -> vector<32x2xf32>
    %c0_9 = arith.constant 0 : index
    %c0_10 = arith.constant 0 : index
    %7 = vector.load %arg5[%c0_9, %c0_10] : memref<8x1xf32, #tpu.memory_space<vmem>>, vector<8x1xf32>
    %8 = tpu.iota {dimensions = array<i32: 1>} : vector<8x16xi32>
    %9 = vector.extract_strided_slice %5 {offsets = [0, 0], sizes = [8, 16], strides = [1, 1]} : vector<32x16xf32> to vector<8x16xf32>
    %10 = vector.extract_strided_slice %5 {offsets = [8, 0], sizes = [8, 16], strides = [1, 1]} : vector<32x16xf32> to vector<8x16xf32>
    %11 = vector.extract_strided_slice %5 {offsets = [16, 0], sizes = [8, 16], strides = [1, 1]} : vector<32x16xf32> to vector<8x16xf32>
    %c1_i32 = arith.constant 1 : i32
    %12 = tpu.dynamic_rotate %11 by %c1_i32 dim 1 : vector<8x16xf32>, i32 -> vector<8x16xf32>
    %13 = vector.extract_strided_slice %5 {offsets = [24, 0], sizes = [8, 16], strides = [1, 1]} : vector<32x16xf32> to vector<8x16xf32>
    %c15_i32 = arith.constant 15 : i32
    %14 = tpu.dynamic_rotate %13 by %c15_i32 dim 1 : vector<8x16xf32>, i32 -> vector<8x16xf32>
    %15 = vector.extract_strided_slice %6 {offsets = [16, 0], sizes = [8, 1], strides = [1, 1]} : vector<32x2xf32> to vector<8x1xf32>
    %16 = vector.extract_strided_slice %6 {offsets = [24, 1], sizes = [8, 1], strides = [1, 1]} : vector<32x2xf32> to vector<8x1xf32>
    %c0_i32 = arith.constant 0 : i32
    %17 = vector.broadcast %c0_i32 : i32 to vector<8x16xi32>
    %18 = arith.cmpi eq, %8, %17 : vector<8x16xi32>
    %19 = vector.shape_cast %15 : vector<8x1xf32> to vector<8x1xf32>
    %20 = vector.broadcast %19 : vector<8x1xf32> to vector<8x16xf32>
    %21 = arith.select %18, %20, %12 : vector<8x16xi1>, vector<8x16xf32>
    %22 = arith.addf %9, %21 : vector<8x16xf32>
    %23 = vector.broadcast %7 : vector<8x1xf32> to vector<8x16xf32>
    %24 = arith.addf %22, %23 : vector<8x16xf32>
    %c15_i32_11 = arith.constant 15 : i32
    %25 = vector.broadcast %c15_i32_11 : i32 to vector<8x16xi32>
    %26 = arith.cmpi eq, %8, %25 : vector<8x16xi32>
    %27 = vector.shape_cast %16 : vector<8x1xf32> to vector<8x1xf32>
    %28 = vector.broadcast %27 : vector<8x1xf32> to vector<8x16xf32>
    %29 = arith.select %26, %28, %14 : vector<8x16xi1>, vector<8x16xf32>
    %30 = arith.addf %10, %29 : vector<8x16xf32>
    %31 = vector.broadcast %7 : vector<8x1xf32> to vector<8x16xf32>
    %32 = arith.addf %30, %31 : vector<8x16xf32>
    %c0_12 = arith.constant 0 : index
    %c0_13 = arith.constant 0 : index
    %c0_14 = arith.constant 0 : index
    %c0_15 = arith.constant 0 : index
    %33 = vector.load %arg6[%c0_12, %c0_13, %c0_14, %c0_15] : memref<1x2x8x16xf32, #tpu.memory_space<vmem>>, vector<1x1x8x16xf32>
    %34 = vector.shape_cast %33 : vector<1x1x8x16xf32> to vector<8x16xf32>
    %35 = vector.shape_cast %24 : vector<8x16xf32> to vector<1x1x8x16xf32>
    tpu.vector_store %arg6[%c0_12, %c0_13, %c0_14, %c0_15], %35 {strides = array<i32>} : memref<1x2x8x16xf32, #tpu.memory_space<vmem>>, vector<1x1x8x16xf32>,
    %c0_16 = arith.constant 0 : index
    %c1 = arith.constant 1 : index
    %c0_17 = arith.constant 0 : index
    %c0_18 = arith.constant 0 : index
    %36 = vector.load %arg6[%c0_16, %c1, %c0_17, %c0_18] : memref<1x2x8x16xf32, #tpu.memory_space<vmem>>, vector<1x1x8x16xf32>
    %37 = vector.shape_cast %36 : vector<1x1x8x16xf32> to vector<8x16xf32>
    %38 = vector.shape_cast %32 : vector<8x16xf32> to vector<1x1x8x16xf32>
    tpu.vector_store %arg6[%c0_16, %c1, %c0_17, %c0_18], %38 {strides = array<i32>} : memref<1x2x8x16xf32, #tpu.memory_space<vmem>>, vector<1x1x8x16xf32>,
    return
  }
  func.func @transform_0(%arg0: i32, %arg1: i32) -> (i32, i32, i32) {
    %c0_i32 = arith.constant 0 : i32
    %c0_i32_0 = arith.constant 0 : i32
    return %arg0, %c0_i32, %arg1 : i32, i32, i32
  }
  func.func @transform_1(%arg0: i32, %arg1: i32) -> (i32, i32, i32, i32) {
    %c0_i32 = arith.constant 0 : i32
    %c0_i32_0 = arith.constant 0 : i32
    %c0_i32_1 = arith.constant 0 : i32
    return %arg0, %arg1, %c0_i32, %c0_i32_0 : i32, i32, i32, i32
  }
  func.func @transform_2(%arg0: i32, %arg1: i32) -> (i32, i32) {
    %c0_i32 = arith.constant 0 : i32
    %c0_i32_0 = arith.constant 0 : i32
    %c0_i32_1 = arith.constant 0 : i32
    return %c0_i32, %c0_i32_0 : i32, i32
  }
  func.func @transform_3(%arg0: i32, %arg1: i32) -> (i32, i32) {
    %c0_i32 = arith.constant 0 : i32
    %c0_i32_0 = arith.constant 0 : i32
    %c0_i32_1 = arith.constant 0 : i32
    return %c0_i32, %c0_i32_0 : i32, i32
  }
  func.func @transform_4(%arg0: i32, %arg1: i32) -> (i32, i32, i32, i32) {
    %c0_i32 = arith.constant 0 : i32
    %c0_i32_0 = arith.constant 0 : i32
    %c0_i32_1 = arith.constant 0 : i32
    return %arg0, %c0_i32, %c0_i32_0, %arg1 : i32, i32, i32, i32
  }
}

</mosaic_0001>

<llo_original>
// kernel: tpu_custom_call.1
$region0: #{tpu_custom_call.1}
  #allocation0 [shape = 'u32[]', space=smem, size = 0x4, offset = 0x4, fixed_abs, tag = 'smem constant byte address 0x4 - core index']
  #allocation1 [shape = 'u32[72,128]{1,0:T(1,128)}', space=vmem, size = 0x9000, scoped, tag = 'internal scratch']
  %s0 = inlined_call_operand.vmem [shape: f32[2,8,16], index: 0, kind: input, shape index: {}]
  %s1 = inlined_call_operand.vmem [shape: f32[2,1,8,2], index: 1, kind: input, shape index: {}]
  %s2 = inlined_call_operand.vmem [shape: f32[32,8], index: 2, kind: input, shape index: {}]
  %s3 = inlined_call_operand.vmem [shape: f32[8,1], index: 3, kind: input, shape index: {}]
  %s4 = inlined_call_operand.hbm [shape: f32[2,2,8,16], index: 4, kind: output, shape index: {}]
  %s5 = sld [smem:[#allocation0]]
  $region49: #{tpu_custom_call.1} parent=0
    _
  %s7 = ssub.s32 1, %s5
  %s8 = scalar_select 0, %s7, %s5
  $region1: #{tpu_custom_call.1} parent=0
    #allocation2 [shape = 'u8[16384]{0}', space=vmem, size = 0x4000, scoped, tag = 'output window, operand 0']
    #allocation3 [shape = 's32[2]{0}', space=sflag, size = 0x8, scoped, tag = 'scoped memory for tpu_custom_call.1']
    %9 = vsyncpa [#allocation3], 0
    %s10 = scalar_lea.sflag [#allocation3], 1
    %11 = vsyncpa %s10, 0
    loop: start=0, step=1, limit=4
    $region2: #{tpu_custom_call.1} parent=1 // loop_pre_header
      _
    $region3: #{tpu_custom_call.1} parent=1 // loop_header
      %s13 = sphi 0, %s17
      %p14 = scmp.ge.s32.totalorder %s13, 4
      %s20 = sphi 0, %s32
      %s21 = sphi 0, %s28
      %s22 = sphi 0, %s20
      %s23 = sphi 0, %s21
      %s24 = sphi 0, %s22
      %s25 = sphi 0, %s23
      %s37 = sphi 0, %s39
      %s40 = sphi 0, %s37
      %s41 = sphi 0, %s40
      %s57 = sphi 0, %s41
      %s65 = sphi 0, %s67
      %s68 = sphi 0, %s65
      %s69 = sphi 0, %s68
      %s85 = sphi 0, %s69
      %s89 = sphi 0, %s89
      %s91 = sphi 0, %s89
      %s92 = sphi 0, %s91
      %s106 = sphi 0, %s92
      %s110 = sphi 0, %s110
      %s112 = sphi 0, %s110
      %s113 = sphi 0, %s112
      %s127 = sphi 0, %s113
      %s135 = sphi 0, %s137
      %s138 = sphi 0, %s135
      %s139 = sphi 0, %s138
      %s155 = sphi 0, %s139
    $region4: #{tpu_custom_call.1} parent=1 // loop_header_branch
      %16 = sbr.rel (%p14) target = $region8
    $region5: #{tpu_custom_call.1} parent=1 // loop_body
      %s18 = ssub.s32 %s13, 1
      %s19 = ssub.s32 %s13, 2
      %s26 = sadd.s32 1, %s21
      %p27 = scmp.ge.s32.totalorder %s26, 1
      %s28 = scalar_select %p27, 0, %s26
      %s29 = sadd.s32 1, %s20
      %s30 = scalar_select %p27, %s29, %s20
      %p31 = scmp.ge.s32.totalorder %s30, 2
      %s32 = scalar_select %p31, 0, %s30
      %s33 = ssub.s32 %s20, %s32
      %s34 = ssub.s32 %s21, %s28
      %s35 = sor.u32 %s33, %s34
      %p36 = scmp.eq.s32.totalorder %s35, 0
      %s38 = sadd.s32 %s37, 1
      %s39 = scalar_select %p36, %s37, %s38
      %p42 = pneg %p36
      %p43 = scmp.eq.s32.totalorder %s13, 1
      %p44 = por %p42, %p43
      %p45 = scmp.ne.s32.totalorder %s37, %s40
      %p46 = scmp.eq.s32.totalorder %s13, 0
      %p47 = por %p45, %p46
      %p48 = scmp.ne.s32.totalorder %s37, %s40
      %p49 = scmp.eq.s32.totalorder %s18, 1
      %p50 = por %p48, %p49
      %p51 = scmp.ne.s32.totalorder %s40, %s41
      %p52 = scmp.eq.s32.totalorder %s18, 0
      %p53 = por %p51, %p52
      %p54 = scmp.ne.s32.totalorder %s40, %s41
      %p55 = scmp.eq.s32.totalorder %s19, 1
      %p56 = por %p54, %p55
      %p58 = scmp.ne.s32.totalorder %s41, %s57
      %p59 = scmp.eq.s32.totalorder %s19, 0
      %p60 = por %p58, %p59
      %s61 = ssub.s32 %s20, %s32
      %s62 = ssub.s32 %s21, %s28
      %s63 = sor.u32 %s61, %s62
      %p64 = scmp.eq.s32.totalorder %s63, 0
      %s66 = sadd.s32 %s65, 1
      %s67 = scalar_select %p64, %s65, %s66
      %p70 = pneg %p64
      %p71 = scmp.eq.s32.totalorder %s13, 1
      %p72 = por %p70, %p71
      %p73 = scmp.ne.s32.totalorder %s65, %s68
      %p74 = scmp.eq.s32.totalorder %s13, 0
      %p75 = por %p73, %p74
      %p76 = scmp.ne.s32.totalorder %s65, %s68
      %p77 = scmp.eq.s32.totalorder %s18, 1
      %p78 = por %p76, %p77
      %p79 = scmp.ne.s32.totalorder %s68, %s69
      %p80 = scmp.eq.s32.totalorder %s18, 0
      %p81 = por %p79, %p80
      %p82 = scmp.ne.s32.totalorder %s68, %s69
      %p83 = scmp.eq.s32.totalorder %s19, 1
      %p84 = por %p82, %p83
      %p86 = scmp.ne.s32.totalorder %s69, %s85
      %p87 = scmp.eq.s32.totalorder %s19, 0
      %p88 = por %p86, %p87
      %s90 = sadd.s32 %s89, 1
      %p93 = scmp.eq.s32.totalorder %s13, 1
      %p94 = scmp.ne.s32.totalorder %s89, %s91
      %p95 = scmp.eq.s32.totalorder %s13, 0
      %p96 = por %p94, %p95
      %p97 = scmp.ne.s32.totalorder %s89, %s91
      %p98 = scmp.eq.s32.totalorder %s18, 1
      %p99 = por %p97, %p98
      %p100 = scmp.ne.s32.totalorder %s91, %s92
      %p101 = scmp.eq.s32.totalorder %s18, 0
      %p102 = por %p100, %p101
      %p103 = scmp.ne.s32.totalorder %s91, %s92
      %p104 = scmp.eq.s32.totalorder %s19, 1
      %p105 = por %p103, %p104
      %p107 = scmp.ne.s32.totalorder %s92, %s106
      %p108 = scmp.eq.s32.totalorder %s19, 0
      %p109 = por %p107, %p108
      %s111 = sadd.s32 %s110, 1
      %p114 = scmp.eq.s32.totalorder %s13, 1
      %p115 = scmp.ne.s32.totalorder %s110, %s112
      %p116 = scmp.eq.s32.totalorder %s13, 0
      %p117 = por %p115, %p116
      %p118 = scmp.ne.s32.totalorder %s110, %s112
      %p119 = scmp.eq.s32.totalorder %s18, 1
      %p120 = por %p118, %p119
      %p121 = scmp.ne.s32.totalorder %s112, %s113
      %p122 = scmp.eq.s32.totalorder %s18, 0
      %p123 = por %p121, %p122
      %p124 = scmp.ne.s32.totalorder %s112, %s113
      %p125 = scmp.eq.s32.totalorder %s19, 1
      %p126 = por %p124, %p125
      %p128 = scmp.ne.s32.totalorder %s113, %s127
      %p129 = scmp.eq.s32.totalorder %s19, 0
      %p130 = por %p128, %p129
      %s131 = ssub.s32 %s20, %s32
      %s132 = ssub.s32 %s21, %s28
      %s133 = sor.u32 %s131, %s132
      %p134 = scmp.eq.s32.totalorder %s133, 0
      %s136 = sadd.s32 %s135, 1
      %s137 = scalar_select %p134, %s135, %s136
      %p140 = pneg %p134
      %p141 = scmp.eq.s32.totalorder %s13, 1
      %p142 = por %p140, %p141
      %p143 = scmp.ne.s32.totalorder %s135, %s138
      %p144 = scmp.eq.s32.totalorder %s13, 0
      %p145 = por %p143, %p144
      %p146 = scmp.ne.s32.totalorder %s135, %s138
      %p147 = scmp.eq.s32.totalorder %s18, 1
      %p148 = por %p146, %p147
      %p149 = scmp.ne.s32.totalorder %s138, %s139
      %p150 = scmp.eq.s32.totalorder %s18, 0
      %p151 = por %p149, %p150
      %p152 = scmp.ne.s32.totalorder %s138, %s139
      %p153 = scmp.eq.s32.totalorder %s19, 1
      %p154 = por %p152, %p153
      %p156 = scmp.ne.s32.totalorder %s139, %s155
      %p157 = scmp.eq.s32.totalorder %s19, 0
      %p158 = por %p156, %p157
      %p159 = scmp.le.s32.totalorder 1, %s13
      %p160 = scmp.lt.s32.totalorder %s13, 3
      %p161 = pnand %p159, %p160
      %p162 = pneg %p161
      // Predicated region
      $region9: #{tpu_custom_call.1} parent=5 // pred_check
        _
      $region10: #{tpu_custom_call.1} parent=5 // pred_check_branch
        %164 = sbr.rel (%p161) target = $region12
      $region11: #{tpu_custom_call.1} parent=5 // pred_region
        %s165 = ssub.s32 %s13, 1
        // Predicated region
        $region13: #{tpu_custom_call.1} parent=11 // pred_check
          %p166 = pneg %p102
        $region14: #{tpu_custom_call.1} parent=11 // pred_check_branch
          %168 = sbr.rel (%p166) target = $region16
        $region15: #{tpu_custom_call.1} parent=11 // pred_region
          _
        $region16: #{tpu_custom_call.1} parent=11 // pred_fallthru
          _
        // Predicated region
        $region17: #{tpu_custom_call.1} parent=11 // pred_check
          %p169 = pneg %p123
        $region18: #{tpu_custom_call.1} parent=11 // pred_check_branch
          %171 = sbr.rel (%p169) target = $region20
        $region19: #{tpu_custom_call.1} parent=11 // pred_region
          _
        $region20: #{tpu_custom_call.1} parent=11 // pred_fallthru
          _
      $region12: #{tpu_custom_call.1} parent=5 // pred_fallthru
        _
      %p172 = scmp.lt.s32.totalorder %s13, 2
      // Predicated region
      $region21: #{tpu_custom_call.1} parent=5 // pred_check
        %p173 = pneg %p172
      $region22: #{tpu_custom_call.1} parent=5 // pred_check_branch
        %175 = sbr.rel (%p173) target = $region24
      $region23: #{tpu_custom_call.1} parent=5 // pred_region
        // Predicated region
        $region25: #{tpu_custom_call.1} parent=23 // pred_check
          %p176 = pneg %p47
        $region26: #{tpu_custom_call.1} parent=23 // pred_check_branch
          %178 = sbr.rel (%p176) target = $region28
        $region27: #{tpu_custom_call.1} parent=23 // pred_region
          %p179 = scmp.lt.s32.totalorder %s20, 1
          %s180 = scalar_select %p179, %s20, 1
          %p181 = scmp.lt.s32.totalorder %s21, 0
          %s182 = scalar_select %p181, %s21, 0
          %s183 = sadd.s32 %s182, %s180
          %s184 = smul.addr %s183, 8
          %s185 = scalar_lea.vmem %s0, %s184
        $region28: #{tpu_custom_call.1} parent=23 // pred_fallthru
          _
        // Predicated region
        $region29: #{tpu_custom_call.1} parent=23 // pred_check
          %p186 = pneg %p75
        $region30: #{tpu_custom_call.1} parent=23 // pred_check_branch
          %188 = sbr.rel (%p186) target = $region32
        $region31: #{tpu_custom_call.1} parent=23 // pred_region
          %p189 = scmp.lt.s32.totalorder %s20, 1
          %s190 = scalar_select %p189, %s20, 1
          %p191 = scmp.lt.s32.totalorder %s21, 0
          %s192 = scalar_select %p191, %s21, 0
          %s193 = sadd.s32 %s192, %s190
          %s194 = smul.addr %s193, 8
          %s195 = scalar_lea.vmem %s1, %s194
        $region32: #{tpu_custom_call.1} parent=23 // pred_fallthru
          _
      $region24: #{tpu_custom_call.1} parent=5 // pred_fallthru
        _
      %p196 = scmp.le.s32.totalorder 1, %s13
      %p197 = scmp.lt.s32.totalorder %s13, 3
      %p198 = pnand %p196, %p197
      %p199 = pneg %p198
      // Predicated region
      $region33: #{tpu_custom_call.1} parent=5 // pred_check
        _
      $region34: #{tpu_custom_call.1} parent=5 // pred_check_branch
        %201 = sbr.rel (%p198) target = $region36
      $region35: #{tpu_custom_call.1} parent=5 // pred_region
        %s202 = ssub.s32 %s13, 1
        %p203 = scmp.lt.s32.totalorder %s22, 1
        %s204 = scalar_select %p203, %s22, 1
        %p205 = scmp.lt.s32.totalorder %s23, 0
        %s206 = scalar_select %p205, %s23, 0
        %s207 = sadd.s32 %s206, %s204
        %s208 = smul.addr %s207, 8
        %s209 = scalar_lea.vmem %s0, %s208
        %p210 = pneg %p53
        %p211 = pneg %p50
        %p212 = scmp.lt.s32.totalorder %s22, 1
        %s213 = scalar_select %p212, %s22, 1
        %p214 = scmp.lt.s32.totalorder %s23, 0
        %s215 = scalar_select %p214, %s23, 0
        %s216 = sadd.s32 %s215, %s213
        %s217 = smul.addr %s216, 8
        %s218 = scalar_lea.vmem %s1, %s217
        %p219 = pneg %p81
        %p220 = pneg %p78
        %p221 = pneg %p102
        %p222 = pneg %p99
        %p223 = pneg %p123
        %p224 = pneg %p120
        %p225 = pneg %p151
        %p226 = pneg %p148
        %s227 = sand.u32 %s138, 1
        %s228 = scalar_lea.sflag [#allocation3], %s227
        %s229 = sand.u32 %s138, 1
        %s230 = smul.addr %s229, 16
        %s231 = scalar_lea.vmem [#allocation2], %s230
        %p232 = scmp.lt.s32.totalorder %s22, 1
        %s233 = scalar_select %p232, %s22, 1
        %p234 = scmp.lt.s32.totalorder %s23, 0
        %s235 = scalar_select %p234, %s23, 0
        %s236 = sadd.s32 %s235, %s233
        %s237 = smul.addr %s236, 8
        %s238 = scalar_lea.vmem %s0, %s237
        %p239 = scmp.lt.s32.totalorder %s22, 1
        %s240 = scalar_select %p239, %s22, 1
        %p241 = scmp.lt.s32.totalorder %s23, 0
        %s242 = scalar_select %p241, %s23, 0
        %s243 = sadd.s32 %s242, %s240
        %s244 = smul.addr %s243, 8
        %s245 = scalar_lea.vmem %s1, %s244
        %v246 = vld [vmem:[%s238] sm:$0xff]
        %v247 = vld [vmem:[%s245] sm:$0xff]
        %v248 = vld [vmem:[%s2] sm:$0xff]
        %v249 = vld [vmem:[%s2 + $0x8] sm:$0xff]
        %v250 = vld [vmem:[%s2 + $0x10] sm:$0xff]
        %v251 = vld [vmem:[%s2 + $0x18] sm:$0xff]
        %vm252 = vcmask 64512
        %v254 = vsel %vm252, %v248, 0
        %v257 = vsel %vm252, %v249, 0
        %v260 = vsel %vm252, %v250, 0
        %v263 = vsel %vm252, %v251, 0
        %265 = vmatpush.msra.mxu0 0.0
        %266 = vmatpush.msra.mxu0 0.0
        %267 = vmatpush.msra.mxu0 0.0
        %268 = vmatpush.msra.mxu0 0.0
        %269 = vmatpush.msra.mxu0 0.0
        %270 = vmatpush.msra.mxu0 0.0
        %271 = vmatpush.msra.mxu0 0.0
        %272 = vmatpush.msra.mxu0 0.0
        %273 = vmatpush.msra.mxu0 0.0
        %274 = vmatpush.msra.mxu0 0.0
        %275 = vmatpush.msra.mxu0 0.0
        %276 = vmatpush.msra.mxu0 0.0
        %277 = vmatpush.msra.mxu0 0.0
        %278 = vmatpush.msra.mxu0 0.0
        %279 = vmatpush.msra.mxu0 0.0
        %280 = vmatpush.msra.mxu0 %v246
        %281 = vmatmul.f32.gmra.mxu0 %v254
        %v282 = vpop.f32.mrf.mxu0
        %v283 = vadd.f32 0.0, %v282
        %284 = vmatmul.f32.gmra.mxu0 %v257
        %v285 = vpop.f32.mrf.mxu0
        %v286 = vadd.f32 0.0, %v285
        %287 = vmatmul.f32.gmra.mxu0 %v260
        %v288 = vpop.f32.mrf.mxu0
        %v289 = vadd.f32 0.0, %v288
        %290 = vmatmul.f32.gmra.mxu0 %v263
        %v291 = vpop.f32.mrf.mxu0
        %v292 = vadd.f32 0.0, %v291
        %293 = vdwg.mxu0
        %294 = vmatpush.msra.mxu0 0.0
        %295 = vmatpush.msra.mxu0 0.0
        %296 = vmatpush.msra.mxu0 0.0
        %297 = vmatpush.msra.mxu0 0.0
        %298 = vmatpush.msra.mxu0 0.0
        %299 = vmatpush.msra.mxu0 0.0
        %300 = vmatpush.msra.mxu0 0.0
        %301 = vmatpush.msra.mxu0 0.0
        %302 = vmatpush.msra.mxu0 0.0
        %303 = vmatpush.msra.mxu0 0.0
        %304 = vmatpush.msra.mxu0 0.0
        %305 = vmatpush.msra.mxu0 0.0
        %306 = vmatpush.msra.mxu0 0.0
        %307 = vmatpush.msra.mxu0 0.0
        %308 = vmatpush.msra.mxu0 0.0
        %309 = vmatpush.msra.mxu0 %v247
        %310 = vmatmul.f32.gmra.mxu0 %v254
        %v311 = vpop.f32.mrf.mxu0
        %312 = vmatmul.f32.gmra.mxu0 %v257
        %v313 = vpop.f32.mrf.mxu0
        %314 = vmatmul.f32.gmra.mxu0 %v260
        %v315 = vpop.f32.mrf.mxu0
        %v316 = vadd.f32 0.0, %v315
        %317 = vmatmul.f32.gmra.mxu0 %v263
        %v318 = vpop.f32.mrf.mxu0
        %v319 = vadd.f32 0.0, %v318
        %320 = vdwg.mxu0
        %v321 = vld [vmem:[%s3] sm:$0xff]
        %v322 = vlaneseq
        %v323 = vand.u32 %v322, 127
        %vm324 = vcmask 1047680
        %325 = vrot.lane.b32.xlu0 %v289, 16
        %v326 = vpop.permute.xlu0 %325
        %v327 = vsel %vm324, %v326, %v289
        %328 = vrot.lane.b32.xlu0 %v327, 16
        %v329 = vpop.permute.xlu0 %328
        %v330 = vsel %vm324, %v329, %v289
        %331 = vrot.lane.b32.xlu0 %v292, 16
        %v332 = vpop.permute.xlu0 %331
        %v333 = vsel %vm324, %v332, %v292
        %334 = vrot.lane.b32.xlu0 %v333, 16
        %v335 = vpop.permute.xlu0 %334
        %v336 = vsel %vm324, %v335, %v292
        %vm337 = vcmp.eq.s32.totalorder %v323, 0
        %339 = vset.pattern.permute.xlu0 0
        %340 = vperm.xlu0 %339, %v316
        %v341 = vpop.permute.xlu0 %340
        %344 = vrot.lane.b32.xlu0 %v330, 113
        %v345 = vpop.permute.xlu0 %344
        %v347 = vsel %vm337, %v341, %v345
        %v348 = vadd.f32 %v283, %v347
        %350 = vset.pattern.permute.xlu0 0
        %351 = vperm.xlu0 %350, %v321
        %v352 = vpop.permute.xlu0 %351
        %v354 = vadd.f32 %v348, %v352
        %vm355 = vcmp.eq.s32.totalorder %v323, 15
        %357 = vset.pattern.permute.xlu0 1
        %358 = vperm.xlu0 %357, %v319
        %v359 = vpop.permute.xlu0 %358
        %362 = vrot.lane.b32.xlu0 %v336, 127
        %v363 = vpop.permute.xlu0 %362
        %v365 = vsel %vm355, %v359, %v363
        %v366 = vadd.f32 %v286, %v365
        %v367 = vadd.f32 %v366, %v352
        %vm368 = vcmask 130048
        %369 = vst.msk [vmem:[%s231] sm:$0xff] %vm368, %v354
        %s370 = scalar_lea.vmem %s231, 8 [#allocation2]
        %371 = vst.msk [vmem:[%s370] sm:$0xff] %vm368, %v367
        %s372 = sand.u32 %s138, 1
        %s373 = scalar_lea.sflag [#allocation3], %s372
        %s374 = sand.u32 %s138, 1
        %s375 = smul.addr %s374, 16
        %s376 = scalar_lea.vmem [#allocation2], %s375
        // Predicated region
        $region37: #{tpu_custom_call.1} parent=35 // pred_check
          %p377 = pneg %p148
        $region38: #{tpu_custom_call.1} parent=35 // pred_check_branch
          %379 = sbr.rel (%p377) target = $region40
        $region39: #{tpu_custom_call.1} parent=35 // pred_region
          %381 = vsyncadd %s373, 0
          %s382 = smul.addr %s22, 2
          %s383 = sadd.s32 %s23, %s382
          %s384 = smul.addr %s383, 8
          %s385 = scalar_lea.hbm %s4, %s384
          %s386 = sshll.u32 %s376, 4
          %s387 = int_to_ptr.vmem [resolvable:$true] %s386
          %s388 = sshll.u32 %s385, 4
          %s389 = int_to_ptr.hbm [resolvable:$true] %s388
          %394 = dma.vmem_to_hbm [thread:$0]  %s387, 256, %s389, %s373, 128, 128, 8
        $region40: #{tpu_custom_call.1} parent=35 // pred_fallthru
          _
      $region36: #{tpu_custom_call.1} parent=5 // pred_fallthru
        _
      %p395 = scmp.le.s32.totalorder 2, %s13
      // Predicated region
      $region41: #{tpu_custom_call.1} parent=5 // pred_check
        %p396 = pneg %p395
      $region42: #{tpu_custom_call.1} parent=5 // pred_check_branch
        %398 = sbr.rel (%p396) target = $region44
      $region43: #{tpu_custom_call.1} parent=5 // pred_region
        %s399 = ssub.s32 %s13, 2
        // Predicated region
        $region45: #{tpu_custom_call.1} parent=43 // pred_check
          %p400 = pneg %p154
        $region46: #{tpu_custom_call.1} parent=43 // pred_check_branch
          %402 = sbr.rel (%p400) target = $region48
        $region47: #{tpu_custom_call.1} parent=43 // pred_region
          %s403 = sand.u32 %s139, 1
          %s404 = scalar_lea.sflag [#allocation3], %s403
          %s405 = sand.u32 %s139, 1
          %s406 = smul.addr %s405, 16
          %s407 = scalar_lea.vmem [#allocation2], %s406
          %409 = dma.done %s404, 256
        $region48: #{tpu_custom_call.1} parent=43 // pred_fallthru
          _
      $region44: #{tpu_custom_call.1} parent=5 // pred_fallthru
        _
    $region6: #{tpu_custom_call.1} parent=1 // loop_footer
      %s17 = sadd.s32 1, %s13
    $region7: #{tpu_custom_call.1} parent=1 // loop_footer_branch
      %12 = sbr.rel target = $region3
    $region8: #{tpu_custom_call.1} parent=1 // loop_exit
      _
    %410 = vsyncpa [#allocation3], 1
    %s411 = scalar_lea.sflag [#allocation3], 1
    %412 = vsyncpa %s411, 1

</llo_original>
